<compile_context>
chip_gen: v6e
topology: v6e:2x2x1
jax: 0.10.0
libtpu: 0.0.40
codegen_flags: <defaults>
</compile_context>

<pallas_src>
import jax
import jax.numpy as jnp
from jax import lax
from jax.experimental import pallas as pl
from jax.experimental.pallas import tpu as pltpu

EPS = 1e-5  # PyTorch nn.LayerNorm default


def layernorm_kernel(x_ref, g_ref, b_ref, o_ref):
    # x_ref: (tm, D), g_ref/b_ref: (1, D), o_ref: (tm, D)
    x = x_ref[...].astype(jnp.float32)
    d_inv = jnp.float32(1.0 / x.shape[-1])
    # single-pass statistics in f32
    s1 = jnp.sum(x, axis=-1, keepdims=True)
    s2 = jnp.sum(x * x, axis=-1, keepdims=True)
    mean = s1 * d_inv
    var = jnp.maximum(s2 * d_inv - mean * mean, 0.0)  # biased var, clamp fp noise
    inv = lax.rsqrt(var + EPS)
    gamma = g_ref[...].astype(jnp.float32)
    beta = b_ref[...].astype(jnp.float32)
    o_ref[...] = ((x - mean) * inv * gamma + beta).astype(o_ref.dtype)


def _vmem_plan():
    """Per-generation (working-set budget, vmem_limit_bytes)."""
    phys = None
    try:
        info = pltpu.get_tpu_info()
        phys = getattr(info, "vmem_capacity_bytes", None)
    except Exception:
        phys = None
    if phys is None:
        phys = 128 << 20  # conservative default: assume v5e/v6e-class
    if phys <= (64 << 20):  # v7x-class: 64 MiB physical VMEM per TC
        budget = 28 << 20
        limit = min(phys - (16 << 20), 44 << 20)
    else:                   # v5e / v6e: 128 MiB physical VMEM
        budget = 48 << 20
        limit = 64 << 20
    return budget, int(limit)


def _choose_tm(rows, D, dtype, *, vmem_budget_bytes, target_block_bytes=8 << 20):
    """Largest row tile whose full working set (double-buffered in/out blocks
    plus the in-kernel f32 intermediates) fits the budget, with a bytes-based
    cap on the input block to amortize per-grid-step overhead."""
    itemsize = jnp.dtype(dtype).itemsize
    # sublane packing: 8 rows for 32-bit, 16 for 16-bit, 32 for 8-bit dtypes
    sublane_mult = 8 * max(1, 4 // itemsize)
    # Per tile row:
    #   input block,  double-buffered: 2 * D * itemsize
    #   output block, double-buffered: 2 * D * itemsize
    #   f32 intermediates (upcast x, x*x, epilogue temp): ~3 * D * 4
    per_row_bytes = 4 * D * itemsize + 3 * D * 4
    max_rows_vmem = max(sublane_mult, vmem_budget_bytes // per_row_bytes)
    # bytes-based cap on the input block (4-8 MiB blocks hit ~86%+ of roofline)
    max_rows_block = max(sublane_mult, target_block_bytes // (D * itemsize))
    tm = min(max_rows_vmem, max_rows_block)
    tm = max(sublane_mult, (tm // sublane_mult) * sublane_mult)
    # never (much) larger than the sublane-rounded row count
    rows_up = ((rows + sublane_mult - 1) // sublane_mult) * sublane_mult
    return min(tm, rows_up)


def norm_forward(x, gamma, beta, *, tm=None):
    """LayerNorm(d_model) applied over the last axis of x (batch, seq, d_model)."""
    B, S, D = x.shape
    rows = B * S
    x2d = x.reshape(rows, D)

    budget, vmem_limit = _vmem_plan()
    if tm is None:
        tm = _choose_tm(rows, D, x.dtype, vmem_budget_bytes=budget)

    # cdiv grid; the ragged last block (if any) is masked by Pallas on store.
    num_tiles = pl.cdiv(rows, tm)

    g2d = gamma.reshape(1, D)
    b2d = beta.reshape(1, D)

    out2d = pl.pallas_call(
        layernorm_kernel,
        out_shape=jax.ShapeDtypeStruct((rows, D), x.dtype),
        grid_spec=pltpu.PrefetchScalarGridSpec(
            num_scalar_prefetch=0,
            grid=(num_tiles,),
            in_specs=[
                pl.BlockSpec((tm, D), lambda i: (i, 0)),
                pl.BlockSpec((1, D), lambda i: (0, 0)),   # gamma: constant block
                pl.BlockSpec((1, D), lambda i: (0, 0)),   # beta:  constant block
            ],
            out_specs=pl.BlockSpec((tm, D), lambda i: (i, 0)),
        ),
        compiler_params=pltpu.CompilerParams(
            dimension_semantics=("parallel",),
            vmem_limit_bytes=vmem_limit,
        ),
    )(x2d, g2d, b2d)

    y = out2d.reshape(B, S, D)
    # next_layer == identity (see TODO above)
    return y


def _reference(x, gamma, beta):
    mean = jnp.mean(x, axis=-1, keepdims=True)
    var = jnp.mean((x - mean) ** 2, axis=-1, keepdims=True)
    return (x - mean) * lax.rsqrt(var + EPS) * gamma + beta


if __name__ == "__main__":
    key = jax.random.PRNGKey(0)
    kx, kg, kb, kx2 = jax.random.split(key, 4)

    # small d_model standing in for 768; S=9 exercises the ragged-tail path
    B, S, D = 2, 9, 128
    x = jax.random.normal(kx, (B, S, D), dtype=jnp.float32)
    # deterministic, non-trivial LayerNorm parameters (PyTorch default is ones/zeros)
    gamma = 1.0 + 0.1 * jax.random.normal(kg, (D,), dtype=jnp.float32)
    beta = 0.1 * jax.random.normal(kb, (D,), dtype=jnp.float32)

    ref = _reference(x, gamma, beta)

    # auto-sized tile (single partial block covering all 18 rows)
    out = jax.block_until_ready(norm_forward(x, gamma, beta))
    assert jnp.allclose(out, ref, atol=1e-4, rtol=1e-5), "f32 mismatch vs reference"

    # forced small tile: multi-tile grid + ragged final block, no padding path
    out_mt = jax.block_until_ready(norm_forward(x, gamma, beta, tm=8))
    assert jnp.allclose(out_mt, ref, atol=1e-4, rtol=1e-5), "multi-tile mismatch"

    # bf16 path: checks sublane-multiple (16) tiling still correct
    xb = jax.random.normal(kx2, (2, 8, D), dtype=jnp.bfloat16)
    outb = jax.block_until_ready(norm_forward(xb, gamma, beta))
    refb = _reference(xb.astype(jnp.float32), gamma, beta).astype(jnp.bfloat16)
    assert jnp.allclose(outb.astype(jnp.float32), refb.astype(jnp.float32),
                        atol=3e-2, rtol=3e-2), "bf16 mismatch vs reference"

    print("KERNEL_OK")
</pallas_src>

<mosaic_0001>
module attributes {stable_mosaic.version = 11 : i64} {
  func.func @layernorm_kernel(%arg0: i32, %arg1: memref<24x128xf32, #tpu.memory_space<vmem>>, %arg2: memref<1x128xf32, #tpu.memory_space<vmem>>, %arg3: memref<1x128xf32, #tpu.memory_space<vmem>>, %arg4: memref<24x128xf32, #tpu.memory_space<vmem>>) attributes {dimension_semantics = [#tpu.dimension_semantics<parallel>], iteration_bounds = array<i64: 1>, scalar_prefetch = 0 : i64, scratch_operands = 0 : i64, tpu.core_type = #tpu.core_type<tc>, window_params = [{transform_indices = @transform_0, window_bounds = array<i64: 24, 128>}, {pipeline_mode = #tpu.pipeline_mode<synchronous>, transform_indices = @transform_1, window_bounds = array<i64: 1, 128>}, {pipeline_mode = #tpu.pipeline_mode<synchronous>, transform_indices = @transform_2, window_bounds = array<i64: 1, 128>}, {transform_indices = @transform_3, window_bounds = array<i64: 24, 128>}]} {
    %c0 = arith.constant 0 : index
    %c0_0 = arith.constant 0 : index
    %0 = vector.load %arg1[%c0, %c0_0] : memref<24x128xf32, #tpu.memory_space<vmem>>, vector<24x128xf32>
    %cst = arith.constant dense<0.000000e+00> : vector<24xf32>
    %1 = vector.multi_reduction <add>, %0, %cst [1] : vector<24x128xf32> to vector<24xf32>
    %2 = vector.shape_cast %1 : vector<24xf32> to vector<24x1xf32>
    %3 = arith.mulf %0, %0 : vector<24x128xf32>
    %cst_1 = arith.constant dense<0.000000e+00> : vector<24xf32>
    %4 = vector.multi_reduction <add>, %3, %cst_1 [1] : vector<24x128xf32> to vector<24xf32>
    %5 = vector.shape_cast %4 : vector<24xf32> to vector<24x1xf32>
    %cst_2 = arith.constant 7.812500e-03 : f32
    %6 = vector.broadcast %cst_2 : f32 to vector<24x1xf32>
    %7 = arith.mulf %2, %6 : vector<24x1xf32>
    %cst_3 = arith.constant 7.812500e-03 : f32
    %8 = vector.broadcast %cst_3 : f32 to vector<24x1xf32>
    %9 = arith.mulf %5, %8 : vector<24x1xf32>
    %10 = arith.mulf %7, %7 : vector<24x1xf32>
    %11 = arith.subf %9, %10 : vector<24x1xf32>
    %cst_4 = arith.constant 0.000000e+00 : f32
    %12 = vector.broadcast %cst_4 : f32 to vector<24x1xf32>
    %13 = arith.maximumf %11, %12 : vector<24x1xf32>
    %cst_5 = arith.constant 9.99999974E-6 : f32
    %14 = vector.broadcast %cst_5 : f32 to vector<24x1xf32>
    %15 = arith.addf %13, %14 : vector<24x1xf32>
    %16 = math.rsqrt %15 : vector<24x1xf32>
    %c0_6 = arith.constant 0 : index
    %c0_7 = arith.constant 0 : index
    %17 = vector.load %arg2[%c0_6, %c0_7] : memref<1x128xf32, #tpu.memory_space<vmem>>, vector<1x128xf32>
    %c0_8 = arith.constant 0 : index
    %c0_9 = arith.constant 0 : index
    %18 = vector.load %arg3[%c0_8, %c0_9] : memref<1x128xf32, #tpu.memory_space<vmem>>, vector<1x128xf32>
    %19 = vector.broadcast %7 : vector<24x1xf32> to vector<24x128xf32>
    %20 = arith.subf %0, %19 : vector<24x128xf32>
    %21 = vector.broadcast %16 : vector<24x1xf32> to vector<24x128xf32>
    %22 = arith.mulf %20, %21 : vector<24x128xf32>
    %23 = vector.broadcast %17 : vector<1x128xf32> to vector<24x128xf32>
    %24 = arith.mulf %22, %23 : vector<24x128xf32>
    %25 = vector.broadcast %18 : vector<1x128xf32> to vector<24x128xf32>
    %26 = arith.addf %24, %25 : vector<24x128xf32>
    %c0_10 = arith.constant 0 : index
    %c0_11 = arith.constant 0 : index
    %27 = vector.load %arg4[%c0_10, %c0_11] : memref<24x128xf32, #tpu.memory_space<vmem>>, vector<24x128xf32>
    tpu.vector_store %arg4[%c0_10, %c0_11], %26 {strides = array<i32>} : memref<24x128xf32, #tpu.memory_space<vmem>>, vector<24x128xf32>,
    return
  }
  func.func @transform_0(%arg0: i32) -> (i32, i32) {
    %c0_i32 = arith.constant 0 : i32
    %c0_i32_0 = arith.constant 0 : i32
    return %arg0, %c0_i32 : i32, i32
  }
  func.func @transform_1(%arg0: i32) -> (i32, i32) {
    %c0_i32 = arith.constant 0 : i32
    %c0_i32_0 = arith.constant 0 : i32
    %c0_i32_1 = arith.constant 0 : i32
    return %c0_i32, %c0_i32_0 : i32, i32
  }
  func.func @transform_2(%arg0: i32) -> (i32, i32) {
    %c0_i32 = arith.constant 0 : i32
    %c0_i32_0 = arith.constant 0 : i32
    %c0_i32_1 = arith.constant 0 : i32
    return %c0_i32, %c0_i32_0 : i32, i32
  }
  func.func @transform_3(%arg0: i32) -> (i32, i32) {
    %c0_i32 = arith.constant 0 : i32
    %c0_i32_0 = arith.constant 0 : i32
    return %arg0, %c0_i32 : i32, i32
  }
}

</mosaic_0001>

<llo_original>
// kernel: tpu_custom_call.1
$region0: #{tpu_custom_call.1}
  #allocation0 [shape = 'u32[]', space=smem, size = 0x4, offset = 0x4, fixed_abs, tag = 'smem constant byte address 0x4 - core index']
  #allocation1 [shape = 'u32[144,128]{1,0:T(1,128)}', space=vmem, size = 0x12000, scoped, tag = 'internal scratch']
  %s0 = inlined_call_operand.hbm [shape: f32[18,128], index: 0, kind: input, shape index: {}]
  %s1 = inlined_call_operand.vmem [shape: f32[1,128], index: 1, kind: input, shape index: {}]
  %s2 = inlined_call_operand.vmem [shape: f32[1,128], index: 2, kind: input, shape index: {}]
  %s3 = inlined_call_operand.hbm [shape: f32[18,128], index: 3, kind: output, shape index: {}]
  %s4 = sld [smem:[#allocation0]]
  $region26: #{tpu_custom_call.1} parent=0
    _
  %s6 = ssub.s32 1, %s4
  %s7 = scalar_select 0, %s6, %s4
  $region1: #{tpu_custom_call.1} parent=0
    #allocation2 [shape = 'u8[12288]{0}', space=vmem, size = 0x3000, scoped, tag = 'input window, operand 0, single buffered']
    #allocation3 [shape = 's32[1]{0}', space=sflag, size = 0x4, scoped, tag = 'scoped memory for tpu_custom_call.1']
    #allocation4 [shape = 's32[1]{0}', space=sflag, size = 0x4, scoped, tag = 'scoped memory for tpu_custom_call.1']
    #allocation5 [shape = 'u8[12288]{0}', space=vmem, size = 0x3000, scoped, tag = 'output window, operand 0, single buffered']
    %8 = vsyncpa [#allocation3], 0
    %9 = vsyncpa [#allocation4], 0
    // Predicated region
    $region2: #{tpu_custom_call.1} parent=1 // pred_check
      _
    $region3: #{tpu_custom_call.1} parent=1 // pred_check_branch
      %11 = sbr.rel (0) target = $region5
    $region4: #{tpu_custom_call.1} parent=1 // pred_region
      %s13 = ssub.s32 384, 384
      %14 = vsyncadd [#allocation3], %s13
      %s15 = sshll.u32 [#allocation2], 4
      %s16 = int_to_ptr.vmem [resolvable:$true] %s15
      %21 = dma.hbm_to_vmem [thread:$0]  %s0, 384, %s16, [#allocation3], 128, 128, 8
    $region5: #{tpu_custom_call.1} parent=1 // pred_fallthru
      _
    // Predicated region
    $region6: #{tpu_custom_call.1} parent=1 // pred_check
      _
    $region7: #{tpu_custom_call.1} parent=1 // pred_check_branch
      %23 = sbr.rel (0) target = $region9
    $region8: #{tpu_custom_call.1} parent=1 // pred_region
      _
    $region9: #{tpu_custom_call.1} parent=1 // pred_fallthru
      _
    // Predicated region
    $region10: #{tpu_custom_call.1} parent=1 // pred_check
      _
    $region11: #{tpu_custom_call.1} parent=1 // pred_check_branch
      %25 = sbr.rel (0) target = $region13
    $region12: #{tpu_custom_call.1} parent=1 // pred_region
      _
    $region13: #{tpu_custom_call.1} parent=1 // pred_fallthru
      _
    // Predicated region
    $region14: #{tpu_custom_call.1} parent=1 // pred_check
      _
    $region15: #{tpu_custom_call.1} parent=1 // pred_check_branch
      %27 = sbr.rel (0) target = $region17
    $region16: #{tpu_custom_call.1} parent=1 // pred_region
      %28 = dma.done [#allocation3], 384
    $region17: #{tpu_custom_call.1} parent=1 // pred_fallthru
      _
    %v29 = vld [vmem:[#allocation2] sm:$0xff]
    %v30 = vld [vmem:[#allocation2 + $0x8] sm:$0xff]
    %v31 = vld [vmem:[#allocation2 + $0x10] sm:$0xff]
    %32 = vadd.xlane.f32.xlu0 %v29
    %v33 = vpop.xlane.xlu0 %32
    %34 = vadd.xlane.f32.xlu0 %v30
    %v35 = vpop.xlane.xlu0 %34
    %36 = vadd.xlane.f32.xlu0 %v31
    %v37 = vpop.xlane.xlu0 %36
    %v38 = vmul.f32 %v29, %v29
    %v39 = vmul.f32 %v30, %v30
    %v40 = vmul.f32 %v31, %v31
    %41 = vadd.xlane.f32.xlu0 %v38
    %v42 = vpop.xlane.xlu0 %41
    %43 = vadd.xlane.f32.xlu0 %v39
    %v44 = vpop.xlane.xlu0 %43
    %45 = vadd.xlane.f32.xlu0 %v40
    %v46 = vpop.xlane.xlu0 %45
    %v47 = vmul.f32 %v33, 0.0078125
    %v48 = vmul.f32 %v35, 0.0078125
    %v49 = vmul.f32 %v37, 0.0078125
    %v50 = vmul.f32 %v42, 0.0078125
    %v51 = vmul.f32 %v44, 0.0078125
    %v52 = vmul.f32 %v46, 0.0078125
    %v53 = vmul.f32 %v47, %v47
    %v54 = vmul.f32 %v48, %v48
    %v55 = vmul.f32 %v49, %v49
    %v56 = vsub.f32 %v50, %v53
    %v57 = vsub.f32 %v51, %v54
    %v58 = vsub.f32 %v52, %v55
    %v59 = vmax.f32 %v56, 0.0
    %v60 = vmax.f32 %v57, 0.0
    %v61 = vmax.f32 %v58, 0.0
    %v62 = vadd.f32 %v59, 1e-05
    %v63 = vadd.f32 %v60, 1e-05
    %v64 = vadd.f32 %v61, 1e-05
    %v65 = vrsqrt.pop %v62
    %v66 = vrsqrt.pop %v63
    %v67 = vrsqrt.pop %v64
    %v68 = vld [vmem:[%s1] sm:$0x1]
    %v69 = vld [vmem:[%s2] sm:$0x1]
    %v70 = vsub.f32 %v29, %v47
    %v71 = vsub.f32 %v30, %v48
    %v72 = vsub.f32 %v31, %v49
    %v73 = vmul.f32 %v70, %v65
    %v74 = vmul.f32 %v71, %v66
    %v75 = vmul.f32 %v72, %v67
    %v77 = vlaneseq
    %v78 = vshrl.u32 %v77, 7
    %v79 = vsub.s32 0, %v78
    %v80 = vrot.slane %v68, %v79
    %v82 = vmul.f32 %v73, %v80
    %v83 = vmul.f32 %v74, %v80
    %v84 = vmul.f32 %v75, %v80
    %v86 = vlaneseq
    %v87 = vshrl.u32 %v86, 7
    %v88 = vsub.s32 0, %v87
    %v89 = vrot.slane %v69, %v88
    %v91 = vadd.f32 %v82, %v89
    %v92 = vadd.f32 %v83, %v89
    %v93 = vadd.f32 %v84, %v89
    %94 = vst [vmem:[#allocation5] sm:$0xff] %v91
    %95 = vst [vmem:[#allocation5 + $0x8] sm:$0xff] %v92
    %96 = vst [vmem:[#allocation5 + $0x10] sm:$0xff] %v93
    // Predicated region
    $region18: #{tpu_custom_call.1} parent=1 // pred_check
      _
    $region19: #{tpu_custom_call.1} parent=1 // pred_check_branch
      %98 = sbr.rel (0) target = $region21
    $region20: #{tpu_custom_call.1} parent=1 // pred_region
      %s100 = ssub.s32 384, 384
      %101 = vsyncadd [#allocation4], %s100
      %s102 = sshll.u32 [#allocation5], 4
      %s103 = int_to_ptr.vmem [resolvable:$true] %s102
      %108 = dma.vmem_to_hbm [thread:$0]  %s103, 384, %s3, [#allocation4], 128, 128, 8
    $region21: #{tpu_custom_call.1} parent=1 // pred_fallthru
      _
    // Predicated region
    $region22: #{tpu_custom_call.1} parent=1 // pred_check
      _
    $region23: #{tpu_custom_call.1} parent=1 // pred_check_branch
      %110 = sbr.rel (0) target = $region25
    $region24: #{tpu_custom_call.1} parent=1 // pred_region
      %111 = dma.done [#allocation4], 384
    $region25: #{tpu_custom_call.1} parent=1 // pred_fallthru
      _
    %112 = vsyncpa [#allocation3], 1
    %113 = vsyncpa [#allocation4], 1

</llo_original>
